<compile_context>
chip_gen: v7x
topology: tpu7x:2x2x1
jax: 0.10.0
libtpu: 0.0.40
codegen_flags: <defaults>
</compile_context>

<pallas_src>
import functools

import jax
import jax.numpy as jnp
from jax.experimental import pallas as pl
from jax.experimental.pallas import tpu as pltpu


def _round_up(x, m):
    return ((x + m - 1) // m) * m


def _tail_layers(h, residual, w1_ref, b1_ref, w2_ref, b2_ref, w3_ref, b3_ref,
                 o_ref):
    """Layers 1..3 + skip connection; h, residual are f32 (tm, C)."""
    bf16 = jnp.bfloat16
    # layer 1
    h = jnp.dot(h.astype(bf16), w1_ref[...],
                preferred_element_type=jnp.float32) + b1_ref[...]
    h = jnp.maximum(h, 0.0)
    # skip connection (after layer idx == layer_num//2 - 1 == 1)
    h = h + residual
    # layer 2
    h = jnp.dot(h.astype(bf16), w2_ref[...],
                preferred_element_type=jnp.float32) + b2_ref[...]
    h = jnp.maximum(h, 0.0)
    # layer 3
    h = jnp.dot(h.astype(bf16), w3_ref[...],
                preferred_element_type=jnp.float32) + b3_ref[...]
    h = jnp.maximum(h, 0.0)
    o_ref[...] = h.astype(o_ref.dtype)


def _mlp_wskip_kernel_fused(x_ref,
                            wcat_ref, bcat_ref,   # fused [layer0 | residual]
                            w1_ref, b1_ref,
                            w2_ref, b2_ref,
                            w3_ref, b3_ref,
                            o_ref):
    C = w1_ref.shape[0]
    x = x_ref[...]                                          # bf16 (tm, K)

    # Fused residual + layer-0 matmul (shared K reduction, shared x operand).
    z = jnp.dot(x, wcat_ref[...], preferred_element_type=jnp.float32)
    z = z + bcat_ref[...]                                   # f32 (tm, 2C)
    h = jnp.maximum(z[:, :C], 0.0)                          # layer 0 + ReLU
    residual = z[:, C:]                                     # residual (no ReLU)

    _tail_layers(h, residual, w1_ref, b1_ref, w2_ref, b2_ref, w3_ref, b3_ref,
                 o_ref)


def _mlp_wskip_kernel_unfused(x_ref,
                              w0_ref, b0_ref,
                              wr_ref, br_ref,
                              w1_ref, b1_ref,
                              w2_ref, b2_ref,
                              w3_ref, b3_ref,
                              o_ref):
    x = x_ref[...]                                          # bf16 (tm, K)
    residual = jnp.dot(x, wr_ref[...],
                       preferred_element_type=jnp.float32) + br_ref[...]
    h = jnp.dot(x, w0_ref[...],
                preferred_element_type=jnp.float32) + b0_ref[...]
    h = jnp.maximum(h, 0.0)
    _tail_layers(h, residual, w1_ref, b1_ref, w2_ref, b2_ref, w3_ref, b3_ref,
                 o_ref)


@functools.partial(jax.jit, static_argnames=("tm",))
def mlp_wskip(x, params, *, tm=256):
    """x: (B, N, in_ch) float32.  params: dict of weights (see init_params)."""
    B, N, K = x.shape
    C = params["wr"].shape[1]
    M = B * N

    # Row tile: big enough to amortize per-step pipeline overhead and fill the
    # MXU, but clamped (8-aligned) for tiny inputs so they aren't padded 16x.
    tm_eff = min(tm, _round_up(M, 8))
    M_pad = _round_up(M, tm_eff)

    x2d = x.reshape(M, K)
    if M_pad != M:
        x2d = jnp.pad(x2d, ((0, M_pad - M), (0, 0)))

    bf16 = jnp.bfloat16
    f32 = jnp.float32
    x2d = x2d.astype(bf16)

    w1 = params["w1"].astype(bf16); b1 = params["b1"].astype(f32)
    w2 = params["w2"].astype(bf16); b2 = params["b2"].astype(f32)
    w3 = params["w3"].astype(bf16); b3 = params["b3"].astype(f32)

    def full(shape):
        return pl.BlockSpec(shape, lambda i: tuple(0 for _ in shape))

    fuse = (C % 128 == 0)
    if fuse:
        # One (K, 2C) matmul instead of two (K, C): shared x operand, single
        # MXU weight push; split is on a 128-lane boundary (free).
        w_cat = jnp.concatenate([params["w0"], params["wr"]], axis=1).astype(bf16)
        b_cat = jnp.concatenate([params["b0"], params["br"]], axis=1).astype(f32)
        kernel = _mlp_wskip_kernel_fused
        head_args = (w_cat, b_cat)
        head_specs = [full((K, 2 * C)), full((1, 2 * C))]
    else:
        w0 = params["w0"].astype(bf16); b0 = params["b0"].astype(f32)
        wr = params["wr"].astype(bf16); br = params["br"].astype(f32)
        kernel = _mlp_wskip_kernel_unfused
        head_args = (w0, b0, wr, br)
        head_specs = [full((K, C)), full((1, C)), full((K, C)), full((1, C))]

    # Rough double-buffered VMEM footprint; only raise the scoped limit when
    # approaching the smallest default (16 MiB on v5e); cap safely below the
    # v7x physical 64 MiB.
    weight_bytes = (K * 2 * C + 3 * C * C) * 2 + (2 * C + 3 * C) * 4
    tile_bytes = tm_eff * K * 2 + tm_eff * C * x.dtype.itemsize
    vmem_est = 2 * (weight_bytes + tile_bytes)
    vmem_limit = None
    if vmem_est > 12 * 2**20:
        vmem_limit = min(2 * vmem_est, 48 * 2**20)

    flops = 2 * M_pad * (K * 2 * C + 3 * C * C)
    bytes_accessed = (M_pad * K * 2            # x (bf16)
                      + weight_bytes           # weights + biases
                      + M_pad * C * 4)         # output (f32)
    cost = pl.CostEstimate(flops=flops, transcendentals=0,
                           bytes_accessed=bytes_accessed)

    out2d = pl.pallas_call(
        kernel,
        out_shape=jax.ShapeDtypeStruct((M_pad, C), x.dtype),
        grid_spec=pl.GridSpec(
            grid=(M_pad // tm_eff,),
            in_specs=[
                pl.BlockSpec((tm_eff, K), lambda i: (i, 0)),   # x rows
                *head_specs,                                   # layer0 / residual
                full((C, C)), full((1, C)),                    # layer 1
                full((C, C)), full((1, C)),                    # layer 2
                full((C, C)), full((1, C)),                    # layer 3
            ],
            out_specs=pl.BlockSpec((tm_eff, C), lambda i: (i, 0)),
        ),
        compiler_params=pltpu.CompilerParams(
            dimension_semantics=("parallel",),
            vmem_limit_bytes=vmem_limit),
        cost_estimate=cost,
    )(x2d, *head_args, w1, b1, w2, b2, w3, b3)

    return out2d[:M].reshape(B, N, C)


def init_params(key, in_ch, intermediate_ch):
    """Deterministic synthetic init (shapes match nn.Linear: (in, out) + (1, out))."""
    ks = jax.random.split(key, 10)
    C = intermediate_ch

    def lin(kw, kb, fan_in, fan_out):
        bound = 1.0 / jnp.sqrt(jnp.float32(fan_in))
        w = jax.random.uniform(kw, (fan_in, fan_out), jnp.float32, -bound, bound)
        b = jax.random.uniform(kb, (1, fan_out), jnp.float32, -bound, bound)
        return w, b

    wr, br = lin(ks[0], ks[1], in_ch, C)
    w0, b0 = lin(ks[2], ks[3], in_ch, C)
    w1, b1 = lin(ks[4], ks[5], C, C)
    w2, b2 = lin(ks[6], ks[7], C, C)
    w3, b3 = lin(ks[8], ks[9], C, C)
    return dict(wr=wr, br=br, w0=w0, b0=b0, w1=w1, b1=b1,
                w2=w2, b2=b2, w3=w3, b3=b3)


def mlp_wskip_ref_f32(x, p):
    """Pure-JAX f32 reference mirroring the PyTorch forward (embed=None)."""
    residual = x @ p["wr"] + p["br"]
    h = jax.nn.relu(x @ p["w0"] + p["b0"])
    h = jax.nn.relu(h @ p["w1"] + p["b1"])
    h = h + residual
    h = jax.nn.relu(h @ p["w2"] + p["b2"])
    h = jax.nn.relu(h @ p["w3"] + p["b3"])
    return h


def mlp_wskip_ref_bf16(x, p):
    """Reference that mirrors the kernel's bf16-matmul / f32-accumulate recipe."""
    bf16 = jnp.bfloat16

    def mm(a, w):
        return jnp.dot(a.astype(bf16), w.astype(bf16),
                       preferred_element_type=jnp.float32)

    x2 = x.reshape(-1, x.shape[-1])
    residual = mm(x2, p["wr"]) + p["br"]
    h = jax.nn.relu(mm(x2, p["w0"]) + p["b0"])
    h = jax.nn.relu(mm(h, p["w1"]) + p["b1"])
    h = h + residual
    h = jax.nn.relu(mm(h, p["w2"]) + p["b2"])
    h = jax.nn.relu(mm(h, p["w3"]) + p["b3"])
    return h.reshape(x.shape[:-1] + (p["wr"].shape[1],))


if __name__ == "__main__":
    # Small shapes consistent with the module: x is (B, N, in_ch).
    B, N, IN_CH, INTER_CH = 2, 8, 32, 128

    key = jax.random.PRNGKey(0)
    kx, kp = jax.random.split(key)
    x = jax.random.normal(kx, (B, N, IN_CH), jnp.float32)
    params = init_params(kp, IN_CH, INTER_CH)

    out = mlp_wskip(x, params)
    out = jax.block_until_ready(out)

    assert out.shape == (B, N, INTER_CH)
    ref_bf16 = mlp_wskip_ref_bf16(x, params)
    ref_f32 = mlp_wskip_ref_f32(x, params)
    assert jnp.allclose(out, ref_bf16, atol=1e-2, rtol=1e-2), "mismatch vs bf16 reference"
    assert jnp.allclose(out, ref_f32, atol=1e-1, rtol=1e-1), "mismatch vs f32 reference"

    print("KERNEL_OK")
</pallas_src>

<mosaic_0001>
module attributes {stable_mosaic.version = 11 : i64} {
  func.func @_mlp_wskip_kernel_fused(%arg0: i32, %arg1: memref<16x32xbf16, #tpu.memory_space<vmem>>, %arg2: memref<32x256xbf16, #tpu.memory_space<vmem>>, %arg3: memref<1x256xf32, #tpu.memory_space<vmem>>, %arg4: memref<128x128xbf16, #tpu.memory_space<vmem>>, %arg5: memref<1x128xf32, #tpu.memory_space<vmem>>, %arg6: memref<128x128xbf16, #tpu.memory_space<vmem>>, %arg7: memref<1x128xf32, #tpu.memory_space<vmem>>, %arg8: memref<128x128xbf16, #tpu.memory_space<vmem>>, %arg9: memref<1x128xf32, #tpu.memory_space<vmem>>, %arg10: memref<16x128xf32, #tpu.memory_space<vmem>>) attributes {dimension_semantics = [#tpu.dimension_semantics<parallel>], iteration_bounds = array<i64: 1>, scalar_prefetch = 0 : i64, scratch_operands = 0 : i64, tpu.core_type = #tpu.core_type<tc>, window_params = [{transform_indices = @transform_0, window_bounds = array<i64: 16, 32>}, {pipeline_mode = #tpu.pipeline_mode<synchronous>, transform_indices = @transform_1, window_bounds = array<i64: 32, 256>}, {pipeline_mode = #tpu.pipeline_mode<synchronous>, transform_indices = @transform_2, window_bounds = array<i64: 1, 256>}, {pipeline_mode = #tpu.pipeline_mode<synchronous>, transform_indices = @transform_3, window_bounds = array<i64: 128, 128>}, {pipeline_mode = #tpu.pipeline_mode<synchronous>, transform_indices = @transform_4, window_bounds = array<i64: 1, 128>}, {pipeline_mode = #tpu.pipeline_mode<synchronous>, transform_indices = @transform_5, window_bounds = array<i64: 128, 128>}, {pipeline_mode = #tpu.pipeline_mode<synchronous>, transform_indices = @transform_6, window_bounds = array<i64: 1, 128>}, {pipeline_mode = #tpu.pipeline_mode<synchronous>, transform_indices = @transform_7, window_bounds = array<i64: 128, 128>}, {pipeline_mode = #tpu.pipeline_mode<synchronous>, transform_indices = @transform_8, window_bounds = array<i64: 1, 128>}, {transform_indices = @transform_9, window_bounds = array<i64: 16, 128>}]} {
    %c0 = arith.constant 0 : index
    %c0_0 = arith.constant 0 : index
    %0 = vector.load %arg1[%c0, %c0_0] : memref<16x32xbf16, #tpu.memory_space<vmem>>, vector<16x32xbf16>
    %c0_1 = arith.constant 0 : index
    %c0_2 = arith.constant 0 : index
    %1 = vector.load %arg2[%c0_1, %c0_2] : memref<32x256xbf16, #tpu.memory_space<vmem>>, vector<32x256xbf16>
    %cst = arith.constant dense<0.000000e+00> : vector<16x256xf32>
    %2 = tpu.matmul %0, %1, %cst {dimension_numbers = #tpu.dot_dimension_numbers<[1], [0], [0], [1], [0, 0, 1, 1], [], []>} : vector<16x32xbf16>, vector<32x256xbf16>, vector<16x256xf32> -> vector<16x256xf32>
    %c0_3 = arith.constant 0 : index
    %c0_4 = arith.constant 0 : index
    %3 = vector.load %arg3[%c0_3, %c0_4] : memref<1x256xf32, #tpu.memory_space<vmem>>, vector<1x256xf32>
    %4 = vector.broadcast %3 : vector<1x256xf32> to vector<16x256xf32>
    %5 = arith.addf %2, %4 : vector<16x256xf32>
    %6 = vector.extract_strided_slice %5 {offsets = [0, 0], sizes = [16, 128], strides = [1, 1]} : vector<16x256xf32> to vector<16x128xf32>
    %cst_5 = arith.constant 0.000000e+00 : f32
    %7 = vector.broadcast %cst_5 : f32 to vector<16x128xf32>
    %8 = arith.maximumf %6, %7 : vector<16x128xf32>
    %9 = vector.extract_strided_slice %5 {offsets = [0, 128], sizes = [16, 128], strides = [1, 1]} : vector<16x256xf32> to vector<16x128xf32>
    %10 = arith.truncf %8 : vector<16x128xf32> to vector<16x128xbf16>
    %c0_6 = arith.constant 0 : index
    %c0_7 = arith.constant 0 : index
    %11 = vector.load %arg4[%c0_6, %c0_7] : memref<128x128xbf16, #tpu.memory_space<vmem>>, vector<128x128xbf16>
    %cst_8 = arith.constant dense<0.000000e+00> : vector<16x128xf32>
    %12 = tpu.matmul %10, %11, %cst_8 {dimension_numbers = #tpu.dot_dimension_numbers<[1], [0], [0], [1], [0, 0, 1, 1], [], []>} : vector<16x128xbf16>, vector<128x128xbf16>, vector<16x128xf32> -> vector<16x128xf32>
    %c0_9 = arith.constant 0 : index
    %c0_10 = arith.constant 0 : index
    %13 = vector.load %arg5[%c0_9, %c0_10] : memref<1x128xf32, #tpu.memory_space<vmem>>, vector<1x128xf32>
    %14 = vector.broadcast %13 : vector<1x128xf32> to vector<16x128xf32>
    %15 = arith.addf %12, %14 : vector<16x128xf32>
    %cst_11 = arith.constant 0.000000e+00 : f32
    %16 = vector.broadcast %cst_11 : f32 to vector<16x128xf32>
    %17 = arith.maximumf %15, %16 : vector<16x128xf32>
    %18 = arith.addf %17, %9 : vector<16x128xf32>
    %19 = arith.truncf %18 : vector<16x128xf32> to vector<16x128xbf16>
    %c0_12 = arith.constant 0 : index
    %c0_13 = arith.constant 0 : index
    %20 = vector.load %arg6[%c0_12, %c0_13] : memref<128x128xbf16, #tpu.memory_space<vmem>>, vector<128x128xbf16>
    %cst_14 = arith.constant dense<0.000000e+00> : vector<16x128xf32>
    %21 = tpu.matmul %19, %20, %cst_14 {dimension_numbers = #tpu.dot_dimension_numbers<[1], [0], [0], [1], [0, 0, 1, 1], [], []>} : vector<16x128xbf16>, vector<128x128xbf16>, vector<16x128xf32> -> vector<16x128xf32>
    %c0_15 = arith.constant 0 : index
    %c0_16 = arith.constant 0 : index
    %22 = vector.load %arg7[%c0_15, %c0_16] : memref<1x128xf32, #tpu.memory_space<vmem>>, vector<1x128xf32>
    %23 = vector.broadcast %22 : vector<1x128xf32> to vector<16x128xf32>
    %24 = arith.addf %21, %23 : vector<16x128xf32>
    %cst_17 = arith.constant 0.000000e+00 : f32
    %25 = vector.broadcast %cst_17 : f32 to vector<16x128xf32>
    %26 = arith.maximumf %24, %25 : vector<16x128xf32>
    %27 = arith.truncf %26 : vector<16x128xf32> to vector<16x128xbf16>
    %c0_18 = arith.constant 0 : index
    %c0_19 = arith.constant 0 : index
    %28 = vector.load %arg8[%c0_18, %c0_19] : memref<128x128xbf16, #tpu.memory_space<vmem>>, vector<128x128xbf16>
    %cst_20 = arith.constant dense<0.000000e+00> : vector<16x128xf32>
    %29 = tpu.matmul %27, %28, %cst_20 {dimension_numbers = #tpu.dot_dimension_numbers<[1], [0], [0], [1], [0, 0, 1, 1], [], []>} : vector<16x128xbf16>, vector<128x128xbf16>, vector<16x128xf32> -> vector<16x128xf32>
    %c0_21 = arith.constant 0 : index
    %c0_22 = arith.constant 0 : index
    %30 = vector.load %arg9[%c0_21, %c0_22] : memref<1x128xf32, #tpu.memory_space<vmem>>, vector<1x128xf32>
    %31 = vector.broadcast %30 : vector<1x128xf32> to vector<16x128xf32>
    %32 = arith.addf %29, %31 : vector<16x128xf32>
    %cst_23 = arith.constant 0.000000e+00 : f32
    %33 = vector.broadcast %cst_23 : f32 to vector<16x128xf32>
    %34 = arith.maximumf %32, %33 : vector<16x128xf32>
    %c0_24 = arith.constant 0 : index
    %c0_25 = arith.constant 0 : index
    %35 = vector.load %arg10[%c0_24, %c0_25] : memref<16x128xf32, #tpu.memory_space<vmem>>, vector<16x128xf32>
    tpu.vector_store %arg10[%c0_24, %c0_25], %34 {strides = array<i32>} : memref<16x128xf32, #tpu.memory_space<vmem>>, vector<16x128xf32>,
    return
  }
  func.func @transform_0(%arg0: i32) -> (i32, i32) {
    %c0_i32 = arith.constant 0 : i32
    %c0_i32_0 = arith.constant 0 : i32
    return %arg0, %c0_i32 : i32, i32
  }
  func.func @transform_1(%arg0: i32) -> (i32, i32) {
    %c0_i32 = arith.constant 0 : i32
    %c0_i32_0 = arith.constant 0 : i32
    %c0_i32_1 = arith.constant 0 : i32
    return %c0_i32, %c0_i32_0 : i32, i32
  }
  func.func @transform_2(%arg0: i32) -> (i32, i32) {
    %c0_i32 = arith.constant 0 : i32
    %c0_i32_0 = arith.constant 0 : i32
    %c0_i32_1 = arith.constant 0 : i32
    return %c0_i32, %c0_i32_0 : i32, i32
  }
  func.func @transform_3(%arg0: i32) -> (i32, i32) {
    %c0_i32 = arith.constant 0 : i32
    %c0_i32_0 = arith.constant 0 : i32
    %c0_i32_1 = arith.constant 0 : i32
    return %c0_i32, %c0_i32_0 : i32, i32
  }
  func.func @transform_4(%arg0: i32) -> (i32, i32) {
    %c0_i32 = arith.constant 0 : i32
    %c0_i32_0 = arith.constant 0 : i32
    %c0_i32_1 = arith.constant 0 : i32
    return %c0_i32, %c0_i32_0 : i32, i32
  }
  func.func @transform_5(%arg0: i32) -> (i32, i32) {
    %c0_i32 = arith.constant 0 : i32
    %c0_i32_0 = arith.constant 0 : i32
    %c0_i32_1 = arith.constant 0 : i32
    return %c0_i32, %c0_i32_0 : i32, i32
  }
  func.func @transform_6(%arg0: i32) -> (i32, i32) {
    %c0_i32 = arith.constant 0 : i32
    %c0_i32_0 = arith.constant 0 : i32
    %c0_i32_1 = arith.constant 0 : i32
    return %c0_i32, %c0_i32_0 : i32, i32
  }
  func.func @transform_7(%arg0: i32) -> (i32, i32) {
    %c0_i32 = arith.constant 0 : i32
    %c0_i32_0 = arith.constant 0 : i32
    %c0_i32_1 = arith.constant 0 : i32
    return %c0_i32, %c0_i32_0 : i32, i32
  }
  func.func @transform_8(%arg0: i32) -> (i32, i32) {
    %c0_i32 = arith.constant 0 : i32
    %c0_i32_0 = arith.constant 0 : i32
    %c0_i32_1 = arith.constant 0 : i32
    return %c0_i32, %c0_i32_0 : i32, i32
  }
  func.func @transform_9(%arg0: i32) -> (i32, i32) {
    %c0_i32 = arith.constant 0 : i32
    %c0_i32_0 = arith.constant 0 : i32
    return %arg0, %c0_i32 : i32, i32
  }
}

</mosaic_0001>

<llo_original>
// kernel: mlp_wskip.1
$region0: #{mlp_wskip.1}
  #allocation0 [shape = 'u32[]', space=smem, size = 0x4, offset = 0x4, fixed_abs, tag = 'smem constant byte address 0x4 - core index']
  #allocation1 [shape = 'u32[144,128]{1,0:T(1,128)}', space=vmem, size = 0x12000, scoped, tag = 'internal scratch']
  %s0 = inlined_call_operand.vmem [shape: bf16[16,32], index: 0, kind: input, shape index: {}]
  %s1 = inlined_call_operand.vmem [shape: bf16[32,256], index: 1, kind: input, shape index: {}]
  %s2 = inlined_call_operand.vmem [shape: f32[1,256], index: 2, kind: input, shape index: {}]
  %s3 = inlined_call_operand.vmem [shape: bf16[128,128], index: 3, kind: input, shape index: {}]
  %s4 = inlined_call_operand.vmem [shape: f32[1,128], index: 4, kind: input, shape index: {}]
  %s5 = inlined_call_operand.vmem [shape: bf16[128,128], index: 5, kind: input, shape index: {}]
  %s6 = inlined_call_operand.vmem [shape: f32[1,128], index: 6, kind: input, shape index: {}]
  %s7 = inlined_call_operand.vmem [shape: bf16[128,128], index: 7, kind: input, shape index: {}]
  %s8 = inlined_call_operand.vmem [shape: f32[1,128], index: 8, kind: input, shape index: {}]
  %s9 = inlined_call_operand.hbm [shape: f32[16,128], index: 9, kind: output, shape index: {}]
  %s10 = sld [smem:[#allocation0]]
  $region46: #{mlp_wskip.1} parent=0
    _
  %s12 = ssub.s32 1, %s10
  %s13 = scalar_select 0, %s12, %s10
  $region1: #{mlp_wskip.1} parent=0
    #allocation2 [shape = 'u8[8192]{0}', space=vmem, size = 0x2000, scoped, tag = 'output window, operand 0, single buffered']
    #allocation3 [shape = 's32[1]{0}', space=sflag, size = 0x4, scoped, tag = 'scoped memory for mlp_wskip.1']
    %14 = vsyncpa [#allocation3], 0
    // Predicated region
    $region2: #{mlp_wskip.1} parent=1 // pred_check
      _
    $region3: #{mlp_wskip.1} parent=1 // pred_check_branch
      %16 = sbr.rel (0) target = $region5
    $region4: #{mlp_wskip.1} parent=1 // pred_region
      _
    $region5: #{mlp_wskip.1} parent=1 // pred_fallthru
      _
    // Predicated region
    $region6: #{mlp_wskip.1} parent=1 // pred_check
      _
    $region7: #{mlp_wskip.1} parent=1 // pred_check_branch
      %18 = sbr.rel (0) target = $region9
    $region8: #{mlp_wskip.1} parent=1 // pred_region
      _
    $region9: #{mlp_wskip.1} parent=1 // pred_fallthru
      _
    // Predicated region
    $region10: #{mlp_wskip.1} parent=1 // pred_check
      _
    $region11: #{mlp_wskip.1} parent=1 // pred_check_branch
      %20 = sbr.rel (0) target = $region13
    $region12: #{mlp_wskip.1} parent=1 // pred_region
      _
    $region13: #{mlp_wskip.1} parent=1 // pred_fallthru
      _
    // Predicated region
    $region14: #{mlp_wskip.1} parent=1 // pred_check
      _
    $region15: #{mlp_wskip.1} parent=1 // pred_check_branch
      %22 = sbr.rel (0) target = $region17
    $region16: #{mlp_wskip.1} parent=1 // pred_region
      _
    $region17: #{mlp_wskip.1} parent=1 // pred_fallthru
      _
    // Predicated region
    $region18: #{mlp_wskip.1} parent=1 // pred_check
      _
    $region19: #{mlp_wskip.1} parent=1 // pred_check_branch
      %24 = sbr.rel (0) target = $region21
    $region20: #{mlp_wskip.1} parent=1 // pred_region
      _
    $region21: #{mlp_wskip.1} parent=1 // pred_fallthru
      _
    // Predicated region
    $region22: #{mlp_wskip.1} parent=1 // pred_check
      _
    $region23: #{mlp_wskip.1} parent=1 // pred_check_branch
      %26 = sbr.rel (0) target = $region25
    $region24: #{mlp_wskip.1} parent=1 // pred_region
      _
    $region25: #{mlp_wskip.1} parent=1 // pred_fallthru
      _
    // Predicated region
    $region26: #{mlp_wskip.1} parent=1 // pred_check
      _
    $region27: #{mlp_wskip.1} parent=1 // pred_check_branch
      %28 = sbr.rel (0) target = $region29
    $region28: #{mlp_wskip.1} parent=1 // pred_region
      _
    $region29: #{mlp_wskip.1} parent=1 // pred_fallthru
      _
    // Predicated region
    $region30: #{mlp_wskip.1} parent=1 // pred_check
      _
    $region31: #{mlp_wskip.1} parent=1 // pred_check_branch
      %30 = sbr.rel (0) target = $region33
    $region32: #{mlp_wskip.1} parent=1 // pred_region
      _
    $region33: #{mlp_wskip.1} parent=1 // pred_fallthru
      _
    // Predicated region
    $region34: #{mlp_wskip.1} parent=1 // pred_check
      _
    $region35: #{mlp_wskip.1} parent=1 // pred_check_branch
      %32 = sbr.rel (0) target = $region37
    $region36: #{mlp_wskip.1} parent=1 // pred_region
      _
    $region37: #{mlp_wskip.1} parent=1 // pred_fallthru
      _
    %v34 = vld [vmem:[%s0] sm:$0xf]
    %v35 = vld [vmem:[%s0 + $0x4] sm:$0xf]
    %v36 = vld [vmem:[%s1] sm:$0xff]
    %v37 = vld [vmem:[%s1 + $0x8] sm:$0xff]
    %v38 = vld [vmem:[%s1 + $0x10] sm:$0xff]
    %v39 = vld [vmem:[%s1 + $0x18] sm:$0xff]
    %v40 = vld [vmem:[%s2] sm:$0x3]
    %v42 = vlaneseq
    %v43 = vshrl.u32 %v42, 7
    %v44 = vsub.s32 0, %v43
    %v45 = vrot.slane %v40, %v44
    %v46 = vlaneseq
    %v47 = vshrl.u32 %v46, 7
    %v48 = vsub.s32 1, %v47
    %v49 = vrot.slane %v40, %v48
    %v54 = vunpack.c.l.b16 %v34
    %v55 = vunpack.c.l.b16 %v35
    %v56 = vpack.c.b16 %v55, %v54
    %v61 = vunpack.c.l.b16 %v36
    %v62 = vunpack.c.h.b16 %v36
    %v63 = vunpack.c.l.b16 %v37
    %v64 = vunpack.c.h.b16 %v37
    %v65 = vunpack.c.l.b16 %v38
    %v66 = vunpack.c.h.b16 %v38
    %v67 = vunpack.c.l.b16 %v39
    %v68 = vunpack.c.h.b16 %v39
    %v69 = vpack.c.b16 %v63, %v61
    %v70 = vpack.c.b16 %v64, %v62
    %v71 = vpack.c.b16 %v67, %v65
    %v72 = vpack.c.b16 %v68, %v66
    %vm77 = vcmask 261120
    %v79 = vsel %vm77, %v56, 0
    %81 = vmatprep.subr.bf16.mxu0 %v70
    %82 = vmatpush1.bf16.msra.mxu0 %v69
    %83 = vmatprep.subr.bf16.mxu0 %v72
    %84 = vmatpush1.bf16.msra.mxu0 %v71
    %85 = vmatprep.subr.bf16.mxu0 0
    %86 = vmatpush1.bf16.msra.mxu0 0
    %87 = vmatprep.subr.bf16.mxu0 0
    %88 = vmatpush1.bf16.msra.mxu0 0
    %89 = vmatprep.subr.bf16.mxu0 0
    %90 = vmatpush1.bf16.msra.mxu0 0
    %91 = vmatprep.subr.bf16.mxu0 0
    %92 = vmatpush1.bf16.msra.mxu0 0
    %93 = vmatprep.subr.bf16.mxu0 0
    %94 = vmatpush1.bf16.msra.mxu0 0
    %95 = vmatprep.subr.bf16.mxu0 0
    %96 = vmatpush1.bf16.msra.mxu0 0
    %97 = vmatprep.subr.bf16.mxu0 0
    %98 = vmatpush1.bf16.msra.mxu0 0
    %99 = vmatprep.subr.bf16.mxu0 0
    %100 = vmatpush1.bf16.msra.mxu0 0
    %101 = vmatprep.subr.bf16.mxu0 0
    %102 = vmatpush1.bf16.msra.mxu0 0
    %103 = vmatprep.subr.bf16.mxu0 0
    %104 = vmatpush1.bf16.msra.mxu0 0
    %105 = vmatprep.subr.bf16.mxu0 0
    %106 = vmatpush1.bf16.msra.mxu0 0
    %107 = vmatprep.subr.bf16.mxu0 0
    %108 = vmatpush1.bf16.msra.mxu0 0
    %109 = vmatprep.subr.bf16.mxu0 0
    %110 = vmatpush1.bf16.msra.mxu0 0
    %111 = vmatprep.subr.bf16.mxu0 0
    %112 = vmatpush1.bf16.msra.mxu0 0
    %113 = vmatprep.mubr.bf16.mxu0 0
    %114 = vmatmul.mubr.bf16.gmra.mrb[0].mxu0 %v79
    %v115 = vpop.f32.mrb[0].mxu0
    %v116 = vadd.f32 %v45, %v115
    %v117 = vpop.f32.mrb[0].mxu0
    %v118 = vadd.f32 %v49, %v117
    %v119 = vpop.f32.mrb[0].mxu0
    %v120 = vadd.f32 %v45, %v119
    %v121 = vpop.f32.mrb[0].mxu0
    %v122 = vadd.f32 %v49, %v121
    %123 = vdwg.mxu0
    %v124 = vmax.f32 %v116, 0.0
    %v125 = vmax.f32 %v120, 0.0
    %v126 = vpack.c.bf16 %v125, %v124
    %v127 = vld [vmem:[%s3] sm:$0xf]
    %v128 = vld [vmem:[%s3 + $0x4] sm:$0xf]
    %v129 = vld [vmem:[%s3 + $0x8] sm:$0xf]
    %v130 = vld [vmem:[%s3 + $0xc] sm:$0xf]
    %v131 = vld [vmem:[%s3 + $0x10] sm:$0xf]
    %v132 = vld [vmem:[%s3 + $0x14] sm:$0xf]
    %v133 = vld [vmem:[%s3 + $0x18] sm:$0xf]
    %v134 = vld [vmem:[%s3 + $0x1c] sm:$0xf]
    %v135 = vld [vmem:[%s3 + $0x20] sm:$0xf]
    %v136 = vld [vmem:[%s3 + $0x24] sm:$0xf]
    %v137 = vld [vmem:[%s3 + $0x28] sm:$0xf]
    %v138 = vld [vmem:[%s3 + $0x2c] sm:$0xf]
    %v139 = vld [vmem:[%s3 + $0x30] sm:$0xf]
    %v140 = vld [vmem:[%s3 + $0x34] sm:$0xf]
    %v141 = vld [vmem:[%s3 + $0x38] sm:$0xf]
    %v142 = vld [vmem:[%s3 + $0x3c] sm:$0xf]
    %v143 = vld [vmem:[%s4] sm:$0x1]
    %v145 = vlaneseq
    %v146 = vshrl.u32 %v145, 7
    %v147 = vsub.s32 0, %v146
    %v148 = vrot.slane %v143, %v147
    %v166 = vunpack.c.l.b16 %v127
    %v167 = vunpack.c.l.b16 %v128
    %v168 = vunpack.c.l.b16 %v129
    %v169 = vunpack.c.l.b16 %v130
    %v170 = vunpack.c.l.b16 %v131
    %v171 = vunpack.c.l.b16 %v132
    %v172 = vunpack.c.l.b16 %v133
    %v173 = vunpack.c.l.b16 %v134
    %v174 = vunpack.c.l.b16 %v135
    %v175 = vunpack.c.l.b16 %v136
    %v176 = vunpack.c.l.b16 %v137
    %v177 = vunpack.c.l.b16 %v138
    %v178 = vunpack.c.l.b16 %v139
    %v179 = vunpack.c.l.b16 %v140
    %v180 = vunpack.c.l.b16 %v141
    %v181 = vunpack.c.l.b16 %v142
    %v182 = vpack.c.b16 %v167, %v166
    %v183 = vpack.c.b16 %v169, %v168
    %v184 = vpack.c.b16 %v171, %v170
    %v185 = vpack.c.b16 %v173, %v172
    %v186 = vpack.c.b16 %v175, %v174
    %v187 = vpack.c.b16 %v177, %v176
    %v188 = vpack.c.b16 %v179, %v178
    %v189 = vpack.c.b16 %v181, %v180
    %198 = vmatprep.subr.bf16.mxu0 0
    %199 = vmatpush1.bf16.msra.mxu0 %v182
    %200 = vmatprep.subr.bf16.mxu0 0
    %201 = vmatpush1.bf16.msra.mxu0 %v183
    %202 = vmatprep.subr.bf16.mxu0 0
    %203 = vmatpush1.bf16.msra.mxu0 %v184
    %204 = vmatprep.subr.bf16.mxu0 0
    %205 = vmatpush1.bf16.msra.mxu0 %v185
    %206 = vmatprep.subr.bf16.mxu0 0
    %207 = vmatpush1.bf16.msra.mxu0 %v186
    %208 = vmatprep.subr.bf16.mxu0 0
    %209 = vmatpush1.bf16.msra.mxu0 %v187
    %210 = vmatprep.subr.bf16.mxu0 0
    %211 = vmatpush1.bf16.msra.mxu0 %v188
    %212 = vmatprep.subr.bf16.mxu0 0
    %213 = vmatpush1.bf16.msra.mxu0 %v189
    %214 = vmatprep.subr.bf16.mxu0 0
    %215 = vmatpush1.bf16.msra.mxu0 0
    %216 = vmatprep.subr.bf16.mxu0 0
    %217 = vmatpush1.bf16.msra.mxu0 0
    %218 = vmatprep.subr.bf16.mxu0 0
    %219 = vmatpush1.bf16.msra.mxu0 0
    %220 = vmatprep.subr.bf16.mxu0 0
    %221 = vmatpush1.bf16.msra.mxu0 0
    %222 = vmatprep.subr.bf16.mxu0 0
    %223 = vmatpush1.bf16.msra.mxu0 0
    %224 = vmatprep.subr.bf16.mxu0 0
    %225 = vmatpush1.bf16.msra.mxu0 0
    %226 = vmatprep.subr.bf16.mxu0 0
    %227 = vmatpush1.bf16.msra.mxu0 0
    %228 = vmatprep.subr.bf16.mxu0 0
    %229 = vmatpush1.bf16.msra.mxu0 0
    %230 = vmatprep.mubr.bf16.mxu0 0
    %231 = vmatmul.mubr.bf16.gmra.mrb[0].mxu0 %v126
    %v232 = vpop.f32.mrb[0].mxu0
    %v233 = vadd.f32 %v148, %v232
    %v234 = vpop.f32.mrb[0].mxu0
    %v235 = vpop.f32.mrb[0].mxu0
    %v236 = vadd.f32 %v148, %v235
    %v237 = vpop.f32.mrb[0].mxu0
    %238 = vdwg.mxu0
    %v239 = vmax.f32 %v233, 0.0
    %v240 = vmax.f32 %v236, 0.0
    %v241 = vadd.f32 %v239, %v118
    %v242 = vadd.f32 %v240, %v122
    %v243 = vpack.c.bf16 %v242, %v241
    %v244 = vld [vmem:[%s5] sm:$0xf]
    %v245 = vld [vmem:[%s5 + $0x4] sm:$0xf]
    %v246 = vld [vmem:[%s5 + $0x8] sm:$0xf]
    %v247 = vld [vmem:[%s5 + $0xc] sm:$0xf]
    %v248 = vld [vmem:[%s5 + $0x10] sm:$0xf]
    %v249 = vld [vmem:[%s5 + $0x14] sm:$0xf]
    %v250 = vld [vmem:[%s5 + $0x18] sm:$0xf]
    %v251 = vld [vmem:[%s5 + $0x1c] sm:$0xf]
    %v252 = vld [vmem:[%s5 + $0x20] sm:$0xf]
    %v253 = vld [vmem:[%s5 + $0x24] sm:$0xf]
    %v254 = vld [vmem:[%s5 + $0x28] sm:$0xf]
    %v255 = vld [vmem:[%s5 + $0x2c] sm:$0xf]
    %v256 = vld [vmem:[%s5 + $0x30] sm:$0xf]
    %v257 = vld [vmem:[%s5 + $0x34] sm:$0xf]
    %v258 = vld [vmem:[%s5 + $0x38] sm:$0xf]
    %v259 = vld [vmem:[%s5 + $0x3c] sm:$0xf]
    %v260 = vld [vmem:[%s6] sm:$0x1]
    %v262 = vlaneseq
    %v263 = vshrl.u32 %v262, 7
    %v264 = vsub.s32 0, %v263
    %v265 = vrot.slane %v260, %v264
    %v283 = vunpack.c.l.b16 %v244
    %v284 = vunpack.c.l.b16 %v245
    %v285 = vunpack.c.l.b16 %v246
    %v286 = vunpack.c.l.b16 %v247
    %v287 = vunpack.c.l.b16 %v248
    %v288 = vunpack.c.l.b16 %v249
    %v289 = vunpack.c.l.b16 %v250
    %v290 = vunpack.c.l.b16 %v251
    %v291 = vunpack.c.l.b16 %v252
    %v292 = vunpack.c.l.b16 %v253
    %v293 = vunpack.c.l.b16 %v254
    %v294 = vunpack.c.l.b16 %v255
    %v295 = vunpack.c.l.b16 %v256
    %v296 = vunpack.c.l.b16 %v257
    %v297 = vunpack.c.l.b16 %v258
    %v298 = vunpack.c.l.b16 %v259
    %v299 = vpack.c.b16 %v284, %v283
    %v300 = vpack.c.b16 %v286, %v285
    %v301 = vpack.c.b16 %v288, %v287
    %v302 = vpack.c.b16 %v290, %v289
    %v303 = vpack.c.b16 %v292, %v291
    %v304 = vpack.c.b16 %v294, %v293
    %v305 = vpack.c.b16 %v296, %v295
    %v306 = vpack.c.b16 %v298, %v297
    %315 = vmatprep.subr.bf16.mxu0 0
    %316 = vmatpush1.bf16.msra.mxu0 %v299
    %317 = vmatprep.subr.bf16.mxu0 0
    %318 = vmatpush1.bf16.msra.mxu0 %v300
    %319 = vmatprep.subr.bf16.mxu0 0
    %320 = vmatpush1.bf16.msra.mxu0 %v301
    %321 = vmatprep.subr.bf16.mxu0 0
    %322 = vmatpush1.bf16.msra.mxu0 %v302
    %323 = vmatprep.subr.bf16.mxu0 0
    %324 = vmatpush1.bf16.msra.mxu0 %v303
    %325 = vmatprep.subr.bf16.mxu0 0
    %326 = vmatpush1.bf16.msra.mxu0 %v304
    %327 = vmatprep.subr.bf16.mxu0 0
    %328 = vmatpush1.bf16.msra.mxu0 %v305
    %329 = vmatprep.subr.bf16.mxu0 0
    %330 = vmatpush1.bf16.msra.mxu0 %v306
    %331 = vmatprep.subr.bf16.mxu0 0
    %332 = vmatpush1.bf16.msra.mxu0 0
    %333 = vmatprep.subr.bf16.mxu0 0
    %334 = vmatpush1.bf16.msra.mxu0 0
    %335 = vmatprep.subr.bf16.mxu0 0
    %336 = vmatpush1.bf16.msra.mxu0 0
    %337 = vmatprep.subr.bf16.mxu0 0
    %338 = vmatpush1.bf16.msra.mxu0 0
    %339 = vmatprep.subr.bf16.mxu0 0
    %340 = vmatpush1.bf16.msra.mxu0 0
    %341 = vmatprep.subr.bf16.mxu0 0
    %342 = vmatpush1.bf16.msra.mxu0 0
    %343 = vmatprep.subr.bf16.mxu0 0
    %344 = vmatpush1.bf16.msra.mxu0 0
    %345 = vmatprep.subr.bf16.mxu0 0
    %346 = vmatpush1.bf16.msra.mxu0 0
    %347 = vmatprep.mubr.bf16.mxu0 0
    %348 = vmatmul.mubr.bf16.gmra.mrb[0].mxu0 %v243
    %v349 = vpop.f32.mrb[0].mxu0
    %v350 = vadd.f32 %v265, %v349
    %v351 = vpop.f32.mrb[0].mxu0
    %v352 = vpop.f32.mrb[0].mxu0
    %v353 = vadd.f32 %v265, %v352
    %v354 = vpop.f32.mrb[0].mxu0
    %355 = vdwg.mxu0
    %v356 = vmax.f32 %v350, 0.0
    %v357 = vmax.f32 %v353, 0.0
    %v358 = vpack.c.bf16 %v357, %v356
    %v359 = vld [vmem:[%s7] sm:$0xf]
    %v360 = vld [vmem:[%s7 + $0x4] sm:$0xf]
    %v361 = vld [vmem:[%s7 + $0x8] sm:$0xf]
    %v362 = vld [vmem:[%s7 + $0xc] sm:$0xf]
    %v363 = vld [vmem:[%s7 + $0x10] sm:$0xf]
    %v364 = vld [vmem:[%s7 + $0x14] sm:$0xf]
    %v365 = vld [vmem:[%s7 + $0x18] sm:$0xf]
    %v366 = vld [vmem:[%s7 + $0x1c] sm:$0xf]
    %v367 = vld [vmem:[%s7 + $0x20] sm:$0xf]
    %v368 = vld [vmem:[%s7 + $0x24] sm:$0xf]
    %v369 = vld [vmem:[%s7 + $0x28] sm:$0xf]
    %v370 = vld [vmem:[%s7 + $0x2c] sm:$0xf]
    %v371 = vld [vmem:[%s7 + $0x30] sm:$0xf]
    %v372 = vld [vmem:[%s7 + $0x34] sm:$0xf]
    %v373 = vld [vmem:[%s7 + $0x38] sm:$0xf]
    %v374 = vld [vmem:[%s7 + $0x3c] sm:$0xf]
    %v375 = vld [vmem:[%s8] sm:$0x1]
    %v377 = vlaneseq
    %v378 = vshrl.u32 %v377, 7
    %v379 = vsub.s32 0, %v378
    %v380 = vrot.slane %v375, %v379
    %v398 = vunpack.c.l.b16 %v359
    %v399 = vunpack.c.l.b16 %v360
    %v400 = vunpack.c.l.b16 %v361
    %v401 = vunpack.c.l.b16 %v362
    %v402 = vunpack.c.l.b16 %v363
    %v403 = vunpack.c.l.b16 %v364
    %v404 = vunpack.c.l.b16 %v365
    %v405 = vunpack.c.l.b16 %v366
    %v406 = vunpack.c.l.b16 %v367
    %v407 = vunpack.c.l.b16 %v368
    %v408 = vunpack.c.l.b16 %v369
    %v409 = vunpack.c.l.b16 %v370
    %v410 = vunpack.c.l.b16 %v371
    %v411 = vunpack.c.l.b16 %v372
    %v412 = vunpack.c.l.b16 %v373
    %v413 = vunpack.c.l.b16 %v374
    %v414 = vpack.c.b16 %v399, %v398
    %v415 = vpack.c.b16 %v401, %v400
    %v416 = vpack.c.b16 %v403, %v402
    %v417 = vpack.c.b16 %v405, %v404
    %v418 = vpack.c.b16 %v407, %v406
    %v419 = vpack.c.b16 %v409, %v408
    %v420 = vpack.c.b16 %v411, %v410
    %v421 = vpack.c.b16 %v413, %v412
    %430 = vmatprep.subr.bf16.mxu0 0
    %431 = vmatpush1.bf16.msra.mxu0 %v414
    %432 = vmatprep.subr.bf16.mxu0 0
    %433 = vmatpush1.bf16.msra.mxu0 %v415
    %434 = vmatprep.subr.bf16.mxu0 0
    %435 = vmatpush1.bf16.msra.mxu0 %v416
    %436 = vmatprep.subr.bf16.mxu0 0
    %437 = vmatpush1.bf16.msra.mxu0 %v417
    %438 = vmatprep.subr.bf16.mxu0 0
    %439 = vmatpush1.bf16.msra.mxu0 %v418
    %440 = vmatprep.subr.bf16.mxu0 0
    %441 = vmatpush1.bf16.msra.mxu0 %v419
    %442 = vmatprep.subr.bf16.mxu0 0
    %443 = vmatpush1.bf16.msra.mxu0 %v420
    %444 = vmatprep.subr.bf16.mxu0 0
    %445 = vmatpush1.bf16.msra.mxu0 %v421
    %446 = vmatprep.subr.bf16.mxu0 0
    %447 = vmatpush1.bf16.msra.mxu0 0
    %448 = vmatprep.subr.bf16.mxu0 0
    %449 = vmatpush1.bf16.msra.mxu0 0
    %450 = vmatprep.subr.bf16.mxu0 0
    %451 = vmatpush1.bf16.msra.mxu0 0
    %452 = vmatprep.subr.bf16.mxu0 0
    %453 = vmatpush1.bf16.msra.mxu0 0
    %454 = vmatprep.subr.bf16.mxu0 0
    %455 = vmatpush1.bf16.msra.mxu0 0
    %456 = vmatprep.subr.bf16.mxu0 0
    %457 = vmatpush1.bf16.msra.mxu0 0
    %458 = vmatprep.subr.bf16.mxu0 0
    %459 = vmatpush1.bf16.msra.mxu0 0
    %460 = vmatprep.subr.bf16.mxu0 0
    %461 = vmatpush1.bf16.msra.mxu0 0
    %462 = vmatprep.mubr.bf16.mxu0 0
    %463 = vmatmul.mubr.bf16.gmra.mrb[0].mxu0 %v358
    %v464 = vpop.f32.mrb[0].mxu0
    %v465 = vadd.f32 %v380, %v464
    %v466 = vpop.f32.mrb[0].mxu0
    %v467 = vpop.f32.mrb[0].mxu0
    %v468 = vadd.f32 %v380, %v467
    %v469 = vpop.f32.mrb[0].mxu0
    %470 = vdwg.mxu0
    %v471 = vmax.f32 %v465, 0.0
    %v472 = vmax.f32 %v468, 0.0
    %473 = vst [vmem:[#allocation2] sm:$0xff] %v471
    %474 = vst [vmem:[#allocation2 + $0x8] sm:$0xff] %v472
    // Predicated region
    $region38: #{mlp_wskip.1} parent=1 // pred_check
      _
    $region39: #{mlp_wskip.1} parent=1 // pred_check_branch
      %476 = sbr.rel (0) target = $region41
    $region40: #{mlp_wskip.1} parent=1 // pred_region
      %s478 = ssub.s32 256, 256
      %479 = vsyncadd [#allocation3], %s478
      %s480 = sshll.u32 [#allocation2], 4
      %s481 = int_to_ptr.vmem [resolvable:$true] %s480
      %486 = dma.vmem_to_hbm [thread:$0]  %s481, 256, %s9, [#allocation3], 128, 128, 8
    $region41: #{mlp_wskip.1} parent=1 // pred_fallthru
      _
    // Predicated region
    $region42: #{mlp_wskip.1} parent=1 // pred_check
      _
    $region43: #{mlp_wskip.1} parent=1 // pred_check_branch
      %488 = sbr.rel (0) target = $region45
    $region44: #{mlp_wskip.1} parent=1 // pred_region
      %489 = dma.done [#allocation3], 256
    $region45: #{mlp_wskip.1} parent=1 // pred_fallthru
      _
    %490 = vsyncpa [#allocation3], 1

</llo_original>
